<compile_context>
chip_gen: v7x
topology: tpu7x:2x2x1
jax: 0.10.0
libtpu: 0.0.40
codegen_flags: <defaults>
</compile_context>

<pallas_src>
import functools

import jax
import jax.numpy as jnp
from jax import lax
from jax.experimental import pallas as pl
from jax.experimental.pallas import tpu as pltpu


def _round_up(x, m):
    return ((x + m - 1) // m) * m


def _deconv_kernel(xp_ref, wt_ref, bt_ref, a_ref, o_ref, slab_ref, *, W, P, L, NB, Cin):
    """Processes NB batch elements per grid step.

    xp_ref  : (NB, Cin, Lpad) bf16  flattened spatial input, zero-padded by >= W+1
                                    on both sides of the lane (H*W) axis.
    wt_ref  : (4*Cout, 9*Cin) bf16  phase-folded transposed-conv weights.
    bt_ref  : (4*Cout, 1)     f32   bias, repeated once per output phase.
    a_ref   : (1,) in SMEM    f32   PReLU slope.
    o_ref   : (4*Cout, NB*L)  f32   output; phases folded into rows, batch into lanes.
    slab_ref: (9*Cin, NB*L)   bf16  VMEM scratch holding the im2col slab.
    """
    # Column (x) index of every flattened spatial position, for boundary masks.
    # Shared by all NB elements; power-of-two W uses a bitwise AND instead of %.
    iota = lax.broadcasted_iota(jnp.int32, (1, L), 1)
    col = (iota & (W - 1)) if (W & (W - 1)) == 0 else (iota % W)
    not_left_edge = col > 0            # needed for taps with dx == 0
    not_right_edge = col < W - 1       # needed for taps with dx == 2

    # Build the im2col slab of the 3x3 padded-input neighbourhood into VMEM scratch.
    # A (dy, dx) window shift == static lane-offset slice at (dy-1)*W + (dx-1).
    # Rows falling outside the image land in the zero padding; columns that would
    # wrap across a row boundary are masked out (after the slice).
    for nb in range(NB):
        lo = nb * L
        for dy in range(3):
            for dx in range(3):
                off = (dy - 1) * W + (dx - 1)
                t = xp_ref[nb, :, P + off:P + off + L]        # (Cin, L) bf16
                if dx == 0:
                    t = jnp.where(not_left_edge, t, jnp.zeros_like(t))
                elif dx == 2:
                    t = jnp.where(not_right_edge, t, jnp.zeros_like(t))
                k = dy * 3 + dx
                slab_ref[k * Cin:(k + 1) * Cin, lo:lo + L] = t

    # Single bf16 MXU matmul covering all 4 output phases, all 16 kernel taps and
    # all NB batch elements; accumulate in f32.
    y = jnp.dot(wt_ref[...], slab_ref[...], preferred_element_type=jnp.float32)
    y = y + bt_ref[...]                                       # deconv bias (f32)
    a = a_ref[0]                                              # PReLU slope (scalar)
    o_ref[...] = jnp.where(y >= 0.0, y, a * y)                # PReLU, lane-dense store


def _fold_weights(w):
    """(Cin, Cout, 4, 4) PyTorch ConvTranspose2d weight -> (4*Cout, 9*Cin) f32.

    Output row (2r+s)*Cout + co, column (3dy+dx)*Cin + ci holds W[ci, co, ky, kx]
    for the kernel tap (ky, kx) that phase (r, s) reads at padded-input offset
    (dy, dx), and zero for the taps that phase never uses.

    Derivation (stride 2, pad 1, k=4): oy = 2*iy - 1 + ky, so for oy = 2m + r the
    valid taps are r=0: ky=3 -> dy=0, ky=1 -> dy=1 ; r=1: ky=2 -> dy=1, ky=0 -> dy=2
    (dy is the offset into the 1-padded input); same for x.
    """
    Cin, Cout = w.shape[0], w.shape[1]
    ky_of = ({0: 3, 1: 1}, {1: 2, 2: 0})                      # [r][dy] -> ky
    wt = jnp.zeros((4 * Cout, 9 * Cin), jnp.float32)
    for r in (0, 1):
        for s in (0, 1):
            p = r * 2 + s
            for dy, ky in ky_of[r].items():
                for dx, kx in ky_of[s].items():
                    k = dy * 3 + dx
                    wt = wt.at[p * Cout:(p + 1) * Cout,
                               k * Cin:(k + 1) * Cin].set(w[:, :, ky, kx].T)
    return wt


def deconv_block(x, params, *, batch_block=None):
    """DeconvBlock.forward (defaults). x: (N, Cin, H, W) -> (N, Cout, 2H, 2W) f32."""
    N, Cin, H, W = x.shape
    w, b, a = params["w"], params["b"], params["a"]
    assert w.shape[0] == Cin and w.shape[2:] == (4, 4), "kernel implements k=4,s=2,p=1"
    assert W >= 2, "edge-mask logic assumes W >= 2"
    Cout = w.shape[1]
    L = H * W
    assert L % 128 == 0, "pad H*W to a multiple of 128 for a lane-dense output store"
    P = W + 1                                    # left pad covers the dy=0/dx=0 shift
    Lpad = _round_up(L + 2 * P, 128)             # lane-aligned total padded length

    # Batch block: largest divisor of N keeping the matmul lane width <= ~4096.
    if batch_block is None:
        NB = 1
        for cand in range(1, N + 1):
            if N % cand == 0 and cand * L <= 4096:
                NB = cand
    else:
        NB = batch_block
    assert N % NB == 0
    grid = (N // NB,)

    # bf16 MXU inputs (halves DMA bytes, avoids f32xf32 MXU emulation); accumulation,
    # bias and PReLU stay f32 in the kernel.
    wt = _fold_weights(w).astype(jnp.bfloat16)                # (4*Cout, 9*Cin)
    bt = jnp.tile(b, 4).reshape(4 * Cout, 1).astype(jnp.float32)
    xp = jnp.pad(x.reshape(N, Cin, L).astype(jnp.bfloat16),
                 ((0, 0), (0, 0), (P, Lpad - L - P)))

    kernel = functools.partial(_deconv_kernel, W=W, P=P, L=L, NB=NB, Cin=Cin)

    flops = 2 * N * (4 * Cout) * (9 * Cin) * L
    bytes_accessed = xp.size * 2 + wt.size * 2 + bt.size * 4 + (4 * Cout) * N * L * 4
    # Per-step VMEM: double-buffered in/out blocks + slab scratch + resident weights.
    per_step = (2 * (NB * Cin * Lpad * 2 + 4 * Cout * NB * L * 4)
                + 9 * Cin * NB * L * 2 + wt.size * 2 + bt.size * 4)
    vmem_limit = int(min(128 * 1024 * 1024, max(16 * 1024 * 1024, 2 * per_step)))

    out = pl.pallas_call(
        kernel,
        out_shape=jax.ShapeDtypeStruct((4 * Cout, N * L), jnp.float32),
        grid=grid,
        in_specs=[
            pl.BlockSpec((NB, Cin, Lpad), lambda i: (i, 0, 0)),      # activations
            pl.BlockSpec((4 * Cout, 9 * Cin), lambda i: (0, 0)),     # folded weights
            pl.BlockSpec((4 * Cout, 1), lambda i: (0, 0)),           # bias
            pl.BlockSpec(memory_space=pltpu.MemorySpace.SMEM),       # PReLU slope
        ],
        out_specs=pl.BlockSpec((4 * Cout, NB * L), lambda i: (0, i)),
        scratch_shapes=[pltpu.VMEM((9 * Cin, NB * L), jnp.bfloat16)],  # im2col slab
        compiler_params=pltpu.CompilerParams(
            dimension_semantics=("parallel",),      # shard batch blocks over TCs (v7x)
            vmem_limit_bytes=vmem_limit),
        cost_estimate=pl.CostEstimate(flops=flops, transcendentals=0,
                                      bytes_accessed=int(bytes_accessed)),
    )(xp, wt, bt, a.astype(jnp.float32))

    # Un-fold the phases: rows are (r, s, co), lanes are (n, m, n').
    out = out.reshape(2, 2, Cout, N, H, W)                    # (r, s, co, n, m, n')
    out = jnp.transpose(out, (3, 2, 4, 0, 5, 1))              # (n, co, m, r, n', s)
    return out.reshape(N, Cout, 2 * H, 2 * W)


def init_params(key, Cin, Cout, k=4):
    kw, kb = jax.random.split(key)
    scale = 1.0 / (Cin * k * k) ** 0.5
    return {
        "w": scale * jax.random.normal(kw, (Cin, Cout, k, k), jnp.float32),
        "b": scale * jax.random.normal(kb, (Cout,), jnp.float32),
        "a": jnp.array([0.25], jnp.float32),    # PReLU default init
    }


def reference(x, w, b, a):
    """Pure-JAX replica of DeconvBlock.forward (defaults), for verification."""
    wf = jnp.transpose(jnp.flip(w, axis=(2, 3)), (1, 0, 2, 3))   # (Cout, Cin, 4, 4)
    y = lax.conv_general_dilated(
        x, wf, window_strides=(1, 1), padding=((2, 2), (2, 2)),
        lhs_dilation=(2, 2), dimension_numbers=("NCHW", "OIHW", "NCHW"),
        precision=lax.Precision.HIGHEST)
    y = y + b.reshape(1, -1, 1, 1)
    return jnp.where(y >= 0.0, y, a[0] * y)                      # PReLU


if __name__ == "__main__":
    key = jax.random.PRNGKey(0)
    kx, kp = jax.random.split(key)
    N, Cin, H, W = 2, 8, 16, 16
    Cout = 8
    x = jax.random.normal(kx, (N, Cin, H, W), jnp.float32)
    params = init_params(kp, Cin, Cout)

    out = jax.block_until_ready(deconv_block(x, params))
    ref = reference(x, params["w"], params["b"], params["a"])

    assert out.shape == ref.shape == (N, Cout, 2 * H, 2 * W)
    max_err = float(jnp.max(jnp.abs(out - ref)))
    # bf16 MXU inputs (f32 accumulation): tolerance loosened accordingly.
    assert jnp.allclose(out, ref, atol=3e-2, rtol=3e-2), f"max abs err {max_err}"
    print("KERNEL_OK")
</pallas_src>

<mosaic_0001>
module attributes {stable_mosaic.version = 11 : i64} {
  func.func @_deconv_kernel(%arg0: i32, %arg1: memref<2x8x384xbf16, #tpu.memory_space<vmem>>, %arg2: memref<32x72xbf16, #tpu.memory_space<vmem>>, %arg3: memref<32x1xf32, #tpu.memory_space<vmem>>, %arg4: memref<1xf32, #tpu.memory_space<smem>>, %arg5: memref<32x512xf32, #tpu.memory_space<vmem>>, %arg6: memref<72x512xbf16, #tpu.memory_space<vmem>>) attributes {dimension_semantics = [#tpu.dimension_semantics<parallel>], iteration_bounds = array<i64: 1>, scalar_prefetch = 0 : i64, scratch_operands = 1 : i64, tpu.core_type = #tpu.core_type<tc>, window_params = [{transform_indices = @transform_0, window_bounds = array<i64: 2, 8, 384>}, {pipeline_mode = #tpu.pipeline_mode<synchronous>, transform_indices = @transform_1, window_bounds = array<i64: 32, 72>}, {pipeline_mode = #tpu.pipeline_mode<synchronous>, transform_indices = @transform_2, window_bounds = array<i64: 32, 1>}, {transform_indices = @transform_3, window_bounds = array<i64: 1>}, {transform_indices = @transform_4, window_bounds = array<i64: 32, 512>}]} {
    %0 = tpu.iota {dimensions = array<i32: 1>} : vector<1x256xi32>
    %c15_i32 = arith.constant 15 : i32
    %1 = vector.broadcast %c15_i32 : i32 to vector<1x256xi32>
    %2 = arith.andi %0, %1 : vector<1x256xi32>
    %c0_i32 = arith.constant 0 : i32
    %3 = vector.broadcast %c0_i32 : i32 to vector<1x256xi32>
    %4 = arith.cmpi sgt, %2, %3 : vector<1x256xi32>
    %c15_i32_0 = arith.constant 15 : i32
    %5 = vector.broadcast %c15_i32_0 : i32 to vector<1x256xi32>
    %6 = arith.cmpi slt, %2, %5 : vector<1x256xi32>
    %c0 = arith.constant 0 : index
    %c0_1 = arith.constant 0 : index
    %c0_2 = arith.constant 0 : index
    %7 = vector.load %arg1[%c0, %c0_1, %c0_2] : memref<2x8x384xbf16, #tpu.memory_space<vmem>>, vector<1x8x256xbf16>
    %8 = vector.shape_cast %7 : vector<1x8x256xbf16> to vector<8x256xbf16>
    %cst = arith.constant 0.000000e+00 : bf16
    %9 = vector.broadcast %cst : bf16 to vector<8x256xbf16>
    %10 = vector.shape_cast %4 : vector<1x256xi1> to vector<1x256xi1>
    %11 = vector.broadcast %10 : vector<1x256xi1> to vector<8x256xi1>
    %12 = arith.select %11, %8, %9 : vector<8x256xi1>, vector<8x256xbf16>
    %c0_3 = arith.constant 0 : index
    %c0_4 = arith.constant 0 : index
    %13 = vector.load %arg6[%c0_3, %c0_4] : memref<72x512xbf16, #tpu.memory_space<vmem>>, vector<8x256xbf16>
    tpu.vector_store %arg6[%c0_3, %c0_4], %12 {strides = array<i32>} : memref<72x512xbf16, #tpu.memory_space<vmem>>, vector<8x256xbf16>,
    %c0_5 = arith.constant 0 : index
    %c0_6 = arith.constant 0 : index
    %c1 = arith.constant 1 : index
    %14 = vector.load %arg1[%c0_5, %c0_6, %c1] : memref<2x8x384xbf16, #tpu.memory_space<vmem>>, vector<1x8x256xbf16>
    %15 = vector.shape_cast %14 : vector<1x8x256xbf16> to vector<8x256xbf16>
    %c8 = arith.constant 8 : index
    %c0_7 = arith.constant 0 : index
    %16 = vector.load %arg6[%c8, %c0_7] : memref<72x512xbf16, #tpu.memory_space<vmem>>, vector<8x256xbf16>
    tpu.vector_store %arg6[%c8, %c0_7], %15 {strides = array<i32>} : memref<72x512xbf16, #tpu.memory_space<vmem>>, vector<8x256xbf16>,
    %c0_8 = arith.constant 0 : index
    %c0_9 = arith.constant 0 : index
    %c2 = arith.constant 2 : index
    %17 = vector.load %arg1[%c0_8, %c0_9, %c2] : memref<2x8x384xbf16, #tpu.memory_space<vmem>>, vector<1x8x256xbf16>
    %18 = vector.shape_cast %17 : vector<1x8x256xbf16> to vector<8x256xbf16>
    %cst_10 = arith.constant 0.000000e+00 : bf16
    %19 = vector.broadcast %cst_10 : bf16 to vector<8x256xbf16>
    %20 = vector.shape_cast %6 : vector<1x256xi1> to vector<1x256xi1>
    %21 = vector.broadcast %20 : vector<1x256xi1> to vector<8x256xi1>
    %22 = arith.select %21, %18, %19 : vector<8x256xi1>, vector<8x256xbf16>
    %c16 = arith.constant 16 : index
    %c0_11 = arith.constant 0 : index
    %23 = vector.load %arg6[%c16, %c0_11] : memref<72x512xbf16, #tpu.memory_space<vmem>>, vector<8x256xbf16>
    tpu.vector_store %arg6[%c16, %c0_11], %22 {strides = array<i32>} : memref<72x512xbf16, #tpu.memory_space<vmem>>, vector<8x256xbf16>,
    %c0_12 = arith.constant 0 : index
    %c0_13 = arith.constant 0 : index
    %c16_14 = arith.constant 16 : index
    %24 = vector.load %arg1[%c0_12, %c0_13, %c16_14] : memref<2x8x384xbf16, #tpu.memory_space<vmem>>, vector<1x8x256xbf16>
    %25 = vector.shape_cast %24 : vector<1x8x256xbf16> to vector<8x256xbf16>
    %cst_15 = arith.constant 0.000000e+00 : bf16
    %26 = vector.broadcast %cst_15 : bf16 to vector<8x256xbf16>
    %27 = vector.shape_cast %4 : vector<1x256xi1> to vector<1x256xi1>
    %28 = vector.broadcast %27 : vector<1x256xi1> to vector<8x256xi1>
    %29 = arith.select %28, %25, %26 : vector<8x256xi1>, vector<8x256xbf16>
    %c24 = arith.constant 24 : index
    %c0_16 = arith.constant 0 : index
    %30 = vector.load %arg6[%c24, %c0_16] : memref<72x512xbf16, #tpu.memory_space<vmem>>, vector<8x256xbf16>
    tpu.vector_store %arg6[%c24, %c0_16], %29 {strides = array<i32>} : memref<72x512xbf16, #tpu.memory_space<vmem>>, vector<8x256xbf16>,
    %c0_17 = arith.constant 0 : index
    %c0_18 = arith.constant 0 : index
    %c17 = arith.constant 17 : index
    %31 = vector.load %arg1[%c0_17, %c0_18, %c17] : memref<2x8x384xbf16, #tpu.memory_space<vmem>>, vector<1x8x256xbf16>
    %32 = vector.shape_cast %31 : vector<1x8x256xbf16> to vector<8x256xbf16>
    %c32 = arith.constant 32 : index
    %c0_19 = arith.constant 0 : index
    %33 = vector.load %arg6[%c32, %c0_19] : memref<72x512xbf16, #tpu.memory_space<vmem>>, vector<8x256xbf16>
    tpu.vector_store %arg6[%c32, %c0_19], %32 {strides = array<i32>} : memref<72x512xbf16, #tpu.memory_space<vmem>>, vector<8x256xbf16>,
    %c0_20 = arith.constant 0 : index
    %c0_21 = arith.constant 0 : index
    %c18 = arith.constant 18 : index
    %34 = vector.load %arg1[%c0_20, %c0_21, %c18] : memref<2x8x384xbf16, #tpu.memory_space<vmem>>, vector<1x8x256xbf16>
    %35 = vector.shape_cast %34 : vector<1x8x256xbf16> to vector<8x256xbf16>
    %cst_22 = arith.constant 0.000000e+00 : bf16
    %36 = vector.broadcast %cst_22 : bf16 to vector<8x256xbf16>
    %37 = vector.shape_cast %6 : vector<1x256xi1> to vector<1x256xi1>
    %38 = vector.broadcast %37 : vector<1x256xi1> to vector<8x256xi1>
    %39 = arith.select %38, %35, %36 : vector<8x256xi1>, vector<8x256xbf16>
    %c40 = arith.constant 40 : index
    %c0_23 = arith.constant 0 : index
    %40 = vector.load %arg6[%c40, %c0_23] : memref<72x512xbf16, #tpu.memory_space<vmem>>, vector<8x256xbf16>
    tpu.vector_store %arg6[%c40, %c0_23], %39 {strides = array<i32>} : memref<72x512xbf16, #tpu.memory_space<vmem>>, vector<8x256xbf16>,
    %c0_24 = arith.constant 0 : index
    %c0_25 = arith.constant 0 : index
    %c32_26 = arith.constant 32 : index
    %41 = vector.load %arg1[%c0_24, %c0_25, %c32_26] : memref<2x8x384xbf16, #tpu.memory_space<vmem>>, vector<1x8x256xbf16>
    %42 = vector.shape_cast %41 : vector<1x8x256xbf16> to vector<8x256xbf16>
    %cst_27 = arith.constant 0.000000e+00 : bf16
    %43 = vector.broadcast %cst_27 : bf16 to vector<8x256xbf16>
    %44 = vector.shape_cast %4 : vector<1x256xi1> to vector<1x256xi1>
    %45 = vector.broadcast %44 : vector<1x256xi1> to vector<8x256xi1>
    %46 = arith.select %45, %42, %43 : vector<8x256xi1>, vector<8x256xbf16>
    %c48 = arith.constant 48 : index
    %c0_28 = arith.constant 0 : index
    %47 = vector.load %arg6[%c48, %c0_28] : memref<72x512xbf16, #tpu.memory_space<vmem>>, vector<8x256xbf16>
    tpu.vector_store %arg6[%c48, %c0_28], %46 {strides = array<i32>} : memref<72x512xbf16, #tpu.memory_space<vmem>>, vector<8x256xbf16>,
    %c0_29 = arith.constant 0 : index
    %c0_30 = arith.constant 0 : index
    %c33 = arith.constant 33 : index
    %48 = vector.load %arg1[%c0_29, %c0_30, %c33] : memref<2x8x384xbf16, #tpu.memory_space<vmem>>, vector<1x8x256xbf16>
    %49 = vector.shape_cast %48 : vector<1x8x256xbf16> to vector<8x256xbf16>
    %c56 = arith.constant 56 : index
    %c0_31 = arith.constant 0 : index
    %50 = vector.load %arg6[%c56, %c0_31] : memref<72x512xbf16, #tpu.memory_space<vmem>>, vector<8x256xbf16>
    tpu.vector_store %arg6[%c56, %c0_31], %49 {strides = array<i32>} : memref<72x512xbf16, #tpu.memory_space<vmem>>, vector<8x256xbf16>,
    %c0_32 = arith.constant 0 : index
    %c0_33 = arith.constant 0 : index
    %c34 = arith.constant 34 : index
    %51 = vector.load %arg1[%c0_32, %c0_33, %c34] : memref<2x8x384xbf16, #tpu.memory_space<vmem>>, vector<1x8x256xbf16>
    %52 = vector.shape_cast %51 : vector<1x8x256xbf16> to vector<8x256xbf16>
    %cst_34 = arith.constant 0.000000e+00 : bf16
    %53 = vector.broadcast %cst_34 : bf16 to vector<8x256xbf16>
    %54 = vector.shape_cast %6 : vector<1x256xi1> to vector<1x256xi1>
    %55 = vector.broadcast %54 : vector<1x256xi1> to vector<8x256xi1>
    %56 = arith.select %55, %52, %53 : vector<8x256xi1>, vector<8x256xbf16>
    %c64 = arith.constant 64 : index
    %c0_35 = arith.constant 0 : index
    %57 = vector.load %arg6[%c64, %c0_35] : memref<72x512xbf16, #tpu.memory_space<vmem>>, vector<8x256xbf16>
    tpu.vector_store %arg6[%c64, %c0_35], %56 {strides = array<i32>} : memref<72x512xbf16, #tpu.memory_space<vmem>>, vector<8x256xbf16>,
    %c1_36 = arith.constant 1 : index
    %c0_37 = arith.constant 0 : index
    %c0_38 = arith.constant 0 : index
    %58 = vector.load %arg1[%c1_36, %c0_37, %c0_38] : memref<2x8x384xbf16, #tpu.memory_space<vmem>>, vector<1x8x256xbf16>
    %59 = vector.shape_cast %58 : vector<1x8x256xbf16> to vector<8x256xbf16>
    %cst_39 = arith.constant 0.000000e+00 : bf16
    %60 = vector.broadcast %cst_39 : bf16 to vector<8x256xbf16>
    %61 = vector.shape_cast %4 : vector<1x256xi1> to vector<1x256xi1>
    %62 = vector.broadcast %61 : vector<1x256xi1> to vector<8x256xi1>
    %63 = arith.select %62, %59, %60 : vector<8x256xi1>, vector<8x256xbf16>
    %c0_40 = arith.constant 0 : index
    %c256 = arith.constant 256 : index
    %64 = vector.load %arg6[%c0_40, %c256] : memref<72x512xbf16, #tpu.memory_space<vmem>>, vector<8x256xbf16>
    tpu.vector_store %arg6[%c0_40, %c256], %63 {strides = array<i32>} : memref<72x512xbf16, #tpu.memory_space<vmem>>, vector<8x256xbf16>,
    %c1_41 = arith.constant 1 : index
    %c0_42 = arith.constant 0 : index
    %c1_43 = arith.constant 1 : index
    %65 = vector.load %arg1[%c1_41, %c0_42, %c1_43] : memref<2x8x384xbf16, #tpu.memory_space<vmem>>, vector<1x8x256xbf16>
    %66 = vector.shape_cast %65 : vector<1x8x256xbf16> to vector<8x256xbf16>
    %c8_44 = arith.constant 8 : index
    %c256_45 = arith.constant 256 : index
    %67 = vector.load %arg6[%c8_44, %c256_45] : memref<72x512xbf16, #tpu.memory_space<vmem>>, vector<8x256xbf16>
    tpu.vector_store %arg6[%c8_44, %c256_45], %66 {strides = array<i32>} : memref<72x512xbf16, #tpu.memory_space<vmem>>, vector<8x256xbf16>,
    %c1_46 = arith.constant 1 : index
    %c0_47 = arith.constant 0 : index
    %c2_48 = arith.constant 2 : index
    %68 = vector.load %arg1[%c1_46, %c0_47, %c2_48] : memref<2x8x384xbf16, #tpu.memory_space<vmem>>, vector<1x8x256xbf16>
    %69 = vector.shape_cast %68 : vector<1x8x256xbf16> to vector<8x256xbf16>
    %cst_49 = arith.constant 0.000000e+00 : bf16
    %70 = vector.broadcast %cst_49 : bf16 to vector<8x256xbf16>
    %71 = vector.shape_cast %6 : vector<1x256xi1> to vector<1x256xi1>
    %72 = vector.broadcast %71 : vector<1x256xi1> to vector<8x256xi1>
    %73 = arith.select %72, %69, %70 : vector<8x256xi1>, vector<8x256xbf16>
    %c16_50 = arith.constant 16 : index
    %c256_51 = arith.constant 256 : index
    %74 = vector.load %arg6[%c16_50, %c256_51] : memref<72x512xbf16, #tpu.memory_space<vmem>>, vector<8x256xbf16>
    tpu.vector_store %arg6[%c16_50, %c256_51], %73 {strides = array<i32>} : memref<72x512xbf16, #tpu.memory_space<vmem>>, vector<8x256xbf16>,
    %c1_52 = arith.constant 1 : index
    %c0_53 = arith.constant 0 : index
    %c16_54 = arith.constant 16 : index
    %75 = vector.load %arg1[%c1_52, %c0_53, %c16_54] : memref<2x8x384xbf16, #tpu.memory_space<vmem>>, vector<1x8x256xbf16>
    %76 = vector.shape_cast %75 : vector<1x8x256xbf16> to vector<8x256xbf16>
    %cst_55 = arith.constant 0.000000e+00 : bf16
    %77 = vector.broadcast %cst_55 : bf16 to vector<8x256xbf16>
    %78 = vector.shape_cast %4 : vector<1x256xi1> to vector<1x256xi1>
    %79 = vector.broadcast %78 : vector<1x256xi1> to vector<8x256xi1>
    %80 = arith.select %79, %76, %77 : vector<8x256xi1>, vector<8x256xbf16>
    %c24_56 = arith.constant 24 : index
    %c256_57 = arith.constant 256 : index
    %81 = vector.load %arg6[%c24_56, %c256_57] : memref<72x512xbf16, #tpu.memory_space<vmem>>, vector<8x256xbf16>
    tpu.vector_store %arg6[%c24_56, %c256_57], %80 {strides = array<i32>} : memref<72x512xbf16, #tpu.memory_space<vmem>>, vector<8x256xbf16>,
    %c1_58 = arith.constant 1 : index
    %c0_59 = arith.constant 0 : index
    %c17_60 = arith.constant 17 : index
    %82 = vector.load %arg1[%c1_58, %c0_59, %c17_60] : memref<2x8x384xbf16, #tpu.memory_space<vmem>>, vector<1x8x256xbf16>
    %83 = vector.shape_cast %82 : vector<1x8x256xbf16> to vector<8x256xbf16>
    %c32_61 = arith.constant 32 : index
    %c256_62 = arith.constant 256 : index
    %84 = vector.load %arg6[%c32_61, %c256_62] : memref<72x512xbf16, #tpu.memory_space<vmem>>, vector<8x256xbf16>
    tpu.vector_store %arg6[%c32_61, %c256_62], %83 {strides = array<i32>} : memref<72x512xbf16, #tpu.memory_space<vmem>>, vector<8x256xbf16>,
    %c1_63 = arith.constant 1 : index
    %c0_64 = arith.constant 0 : index
    %c18_65 = arith.constant 18 : index
    %85 = vector.load %arg1[%c1_63, %c0_64, %c18_65] : memref<2x8x384xbf16, #tpu.memory_space<vmem>>, vector<1x8x256xbf16>
    %86 = vector.shape_cast %85 : vector<1x8x256xbf16> to vector<8x256xbf16>
    %cst_66 = arith.constant 0.000000e+00 : bf16
    %87 = vector.broadcast %cst_66 : bf16 to vector<8x256xbf16>
    %88 = vector.shape_cast %6 : vector<1x256xi1> to vector<1x256xi1>
    %89 = vector.broadcast %88 : vector<1x256xi1> to vector<8x256xi1>
    %90 = arith.select %89, %86, %87 : vector<8x256xi1>, vector<8x256xbf16>
    %c40_67 = arith.constant 40 : index
    %c256_68 = arith.constant 256 : index
    %91 = vector.load %arg6[%c40_67, %c256_68] : memref<72x512xbf16, #tpu.memory_space<vmem>>, vector<8x256xbf16>
    tpu.vector_store %arg6[%c40_67, %c256_68], %90 {strides = array<i32>} : memref<72x512xbf16, #tpu.memory_space<vmem>>, vector<8x256xbf16>,
    %c1_69 = arith.constant 1 : index
    %c0_70 = arith.constant 0 : index
    %c32_71 = arith.constant 32 : index
    %92 = vector.load %arg1[%c1_69, %c0_70, %c32_71] : memref<2x8x384xbf16, #tpu.memory_space<vmem>>, vector<1x8x256xbf16>
    %93 = vector.shape_cast %92 : vector<1x8x256xbf16> to vector<8x256xbf16>
    %cst_72 = arith.constant 0.000000e+00 : bf16
    %94 = vector.broadcast %cst_72 : bf16 to vector<8x256xbf16>
    %95 = vector.shape_cast %4 : vector<1x256xi1> to vector<1x256xi1>
    %96 = vector.broadcast %95 : vector<1x256xi1> to vector<8x256xi1>
    %97 = arith.select %96, %93, %94 : vector<8x256xi1>, vector<8x256xbf16>
    %c48_73 = arith.constant 48 : index
    %c256_74 = arith.constant 256 : index
    %98 = vector.load %arg6[%c48_73, %c256_74] : memref<72x512xbf16, #tpu.memory_space<vmem>>, vector<8x256xbf16>
    tpu.vector_store %arg6[%c48_73, %c256_74], %97 {strides = array<i32>} : memref<72x512xbf16, #tpu.memory_space<vmem>>, vector<8x256xbf16>,
    %c1_75 = arith.constant 1 : index
    %c0_76 = arith.constant 0 : index
    %c33_77 = arith.constant 33 : index
    %99 = vector.load %arg1[%c1_75, %c0_76, %c33_77] : memref<2x8x384xbf16, #tpu.memory_space<vmem>>, vector<1x8x256xbf16>
    %100 = vector.shape_cast %99 : vector<1x8x256xbf16> to vector<8x256xbf16>
    %c56_78 = arith.constant 56 : index
    %c256_79 = arith.constant 256 : index
    %101 = vector.load %arg6[%c56_78, %c256_79] : memref<72x512xbf16, #tpu.memory_space<vmem>>, vector<8x256xbf16>
    tpu.vector_store %arg6[%c56_78, %c256_79], %100 {strides = array<i32>} : memref<72x512xbf16, #tpu.memory_space<vmem>>, vector<8x256xbf16>,
    %c1_80 = arith.constant 1 : index
    %c0_81 = arith.constant 0 : index
    %c34_82 = arith.constant 34 : index
    %102 = vector.load %arg1[%c1_80, %c0_81, %c34_82] : memref<2x8x384xbf16, #tpu.memory_space<vmem>>, vector<1x8x256xbf16>
    %103 = vector.shape_cast %102 : vector<1x8x256xbf16> to vector<8x256xbf16>
    %cst_83 = arith.constant 0.000000e+00 : bf16
    %104 = vector.broadcast %cst_83 : bf16 to vector<8x256xbf16>
    %105 = vector.shape_cast %6 : vector<1x256xi1> to vector<1x256xi1>
    %106 = vector.broadcast %105 : vector<1x256xi1> to vector<8x256xi1>
    %107 = arith.select %106, %103, %104 : vector<8x256xi1>, vector<8x256xbf16>
    %c64_84 = arith.constant 64 : index
    %c256_85 = arith.constant 256 : index
    %108 = vector.load %arg6[%c64_84, %c256_85] : memref<72x512xbf16, #tpu.memory_space<vmem>>, vector<8x256xbf16>
    tpu.vector_store %arg6[%c64_84, %c256_85], %107 {strides = array<i32>} : memref<72x512xbf16, #tpu.memory_space<vmem>>, vector<8x256xbf16>,
    %c0_86 = arith.constant 0 : index
    %c0_87 = arith.constant 0 : index
    %109 = vector.load %arg2[%c0_86, %c0_87] : memref<32x72xbf16, #tpu.memory_space<vmem>>, vector<32x72xbf16>
    %c0_88 = arith.constant 0 : index
    %c0_89 = arith.constant 0 : index
    %110 = vector.load %arg6[%c0_88, %c0_89] : memref<72x512xbf16, #tpu.memory_space<vmem>>, vector<72x512xbf16>
    %cst_90 = arith.constant dense<0.000000e+00> : vector<32x512xf32>
    %111 = tpu.matmul %109, %110, %cst_90 {dimension_numbers = #tpu.dot_dimension_numbers<[1], [0], [0], [1], [0, 0, 1, 1], [], []>} : vector<32x72xbf16>, vector<72x512xbf16>, vector<32x512xf32> -> vector<32x512xf32>
    %c0_91 = arith.constant 0 : index
    %c0_92 = arith.constant 0 : index
    %112 = vector.load %arg3[%c0_91, %c0_92] : memref<32x1xf32, #tpu.memory_space<vmem>>, vector<32x1xf32>
    %113 = vector.broadcast %112 : vector<32x1xf32> to vector<32x512xf32>
    %114 = arith.addf %111, %113 : vector<32x512xf32>
    %c0_93 = arith.constant 0 : index
    %115 = memref.load %arg4[%c0_93] : memref<1xf32, #tpu.memory_space<smem>>
    %cst_94 = arith.constant 0.000000e+00 : f32
    %116 = vector.broadcast %cst_94 : f32 to vector<32x512xf32>
    %117 = arith.cmpf oge, %114, %116 : vector<32x512xf32>
    %118 = vector.broadcast %115 : f32 to vector<32x512xf32>
    %119 = arith.mulf %118, %114 : vector<32x512xf32>
    %120 = arith.select %117, %114, %119 : vector<32x512xi1>, vector<32x512xf32>
    %c0_95 = arith.constant 0 : index
    %c0_96 = arith.constant 0 : index
    %121 = vector.load %arg5[%c0_95, %c0_96] : memref<32x512xf32, #tpu.memory_space<vmem>>, vector<32x512xf32>
    tpu.vector_store %arg5[%c0_95, %c0_96], %120 {strides = array<i32>} : memref<32x512xf32, #tpu.memory_space<vmem>>, vector<32x512xf32>,
    return
  }
  func.func @transform_0(%arg0: i32) -> (i32, i32, i32) {
    %c0_i32 = arith.constant 0 : i32
    %c0_i32_0 = arith.constant 0 : i32
    %c0_i32_1 = arith.constant 0 : i32
    return %arg0, %c0_i32, %c0_i32_0 : i32, i32, i32
  }
  func.func @transform_1(%arg0: i32) -> (i32, i32) {
    %c0_i32 = arith.constant 0 : i32
    %c0_i32_0 = arith.constant 0 : i32
    %c0_i32_1 = arith.constant 0 : i32
    return %c0_i32, %c0_i32_0 : i32, i32
  }
  func.func @transform_2(%arg0: i32) -> (i32, i32) {
    %c0_i32 = arith.constant 0 : i32
    %c0_i32_0 = arith.constant 0 : i32
    %c0_i32_1 = arith.constant 0 : i32
    return %c0_i32, %c0_i32_0 : i32, i32
  }
  func.func @transform_3(%arg0: i32) -> i32 {
    %c0_i32 = arith.constant 0 : i32
    %c0_i32_0 = arith.constant 0 : i32
    return %c0_i32 : i32
  }
  func.func @transform_4(%arg0: i32) -> (i32, i32) {
    %c0_i32 = arith.constant 0 : i32
    %c0_i32_0 = arith.constant 0 : i32
    return %c0_i32, %arg0 : i32, i32
  }
}

</mosaic_0001>

<llo_original>
// kernel: tpu_custom_call.1
$region0: #{tpu_custom_call.1}
  #allocation0 [shape = 'u32[]', space=smem, size = 0x4, offset = 0x4, fixed_abs, tag = 'smem constant byte address 0x4 - core index']
  #allocation1 [shape = 'u32[144,128]{1,0:T(1,128)}', space=vmem, size = 0x12000, scoped, tag = 'internal scratch']
  #allocation2 [shape = 'bf16[72,512]{1,0:T(8,128)(2,1)}', space=vmem, size = 0x12000, scoped, tag = 'scratch operand']
  #allocation3 [shape = 'f32[1]{0:T(128)S(6)}', space=smem, size = 0x200, scoped, tag = 'scoped memory for tpu_custom_call.1']
  %s0 = inlined_call_operand.vmem [shape: bf16[2,8,384], index: 0, kind: input, shape index: {}]
  %s1 = inlined_call_operand.vmem [shape: bf16[32,72], index: 1, kind: input, shape index: {}]
  %s2 = inlined_call_operand.vmem [shape: f32[32,1], index: 2, kind: input, shape index: {}]
  %s3 = inlined_call_operand.<no memory space> [shape: f32[1], index: 3, kind: input, shape index: {}]
  %s4 = inlined_call_operand.hbm [shape: f32[32,512], index: 4, kind: output, shape index: {}]
  %s5 = sld [smem:[#allocation0]]
  $region26: #{tpu_custom_call.1} parent=0
    _
  %s7 = ssub.s32 1, %s5
  %s8 = scalar_select 0, %s7, %s5
  %9 = sst [smem:[#allocation3]] %s3
  $region1: #{tpu_custom_call.1} parent=0
    #allocation4 [shape = 'u8[65536]{0}', space=vmem, size = 0x10000, scoped, tag = 'output window, operand 0, single buffered']
    #allocation5 [shape = 's32[1]{0}', space=sflag, size = 0x4, scoped, tag = 'scoped memory for tpu_custom_call.1']
    %10 = vsyncpa [#allocation5], 0
    // Predicated region
    $region2: #{tpu_custom_call.1} parent=1 // pred_check
      _
    $region3: #{tpu_custom_call.1} parent=1 // pred_check_branch
      %12 = sbr.rel (0) target = $region5
    $region4: #{tpu_custom_call.1} parent=1 // pred_region
      _
    $region5: #{tpu_custom_call.1} parent=1 // pred_fallthru
      _
    // Predicated region
    $region6: #{tpu_custom_call.1} parent=1 // pred_check
      _
    $region7: #{tpu_custom_call.1} parent=1 // pred_check_branch
      %14 = sbr.rel (0) target = $region9
    $region8: #{tpu_custom_call.1} parent=1 // pred_region
      _
    $region9: #{tpu_custom_call.1} parent=1 // pred_fallthru
      _
    // Predicated region
    $region10: #{tpu_custom_call.1} parent=1 // pred_check
      _
    $region11: #{tpu_custom_call.1} parent=1 // pred_check_branch
      %16 = sbr.rel (0) target = $region13
    $region12: #{tpu_custom_call.1} parent=1 // pred_region
      _
    $region13: #{tpu_custom_call.1} parent=1 // pred_fallthru
      _
    // Predicated region
    $region14: #{tpu_custom_call.1} parent=1 // pred_check
      _
    $region15: #{tpu_custom_call.1} parent=1 // pred_check_branch
      %18 = sbr.rel (0) target = $region17
    $region16: #{tpu_custom_call.1} parent=1 // pred_region
      _
    $region17: #{tpu_custom_call.1} parent=1 // pred_fallthru
      _
    %v22 = vlaneseq
    %v23 = vand.u32 %v22, 127
    %v24 = vadd.s32 %v23, 128
    %v25 = vand.u32 %v23, 15
    %v26 = vand.u32 %v24, 15
    %vm27 = vcmp.gt.s32.totalorder %v25, 0
    %vm28 = vcmp.gt.s32.totalorder %v26, 0
    %vm29 = vcmp.lt.s32.totalorder %v25, 15
    %vm30 = vcmp.lt.s32.totalorder %v26, 15
    %v31 = vld [vmem:[%s0] sm:$0xff]
    %v32 = vsel %vm27, 1, 0
    %v33 = vsel %vm28, 1, 0
    %vm34 = vcmp.eq.s32.totalorder %v32, 1
    %vm35 = vcmp.eq.s32.totalorder %v33, 1
    %vm36 = vmpackc.low %vm35, %vm34
    %v37 = vsel %vm36, %v31, 0
    %38 = vst [vmem:[#allocation2] sm:$0xff] %v37
    %v39 = vld [vmem:[%s0] sm:$0xff]
    %v40 = vld [vmem:[%s0 + $0x8] sm:$0xf]
    %43 = vrot.lane.b32.xlu0 %v39, 127
    %v44 = vpop.permute.xlu0 %43
    %45 = vrot.lane.b32.xlu0 %v40, 127
    %v46 = vpop.permute.xlu0 %45
    %v47 = vrot.slane %v44, 4
    %v48 = vrot.slane %v46, 4
    %vm49 = vcmask 1043456
    %v50 = vsel %vm49, %v47, %v48
    %vm51 = vcmask 1039360
    %v52 = vsel %vm51, %v44, %v50
    %54 = vst [vmem:[#allocation2 + $0x10] sm:$0xff] %v52
    %v55 = vld [vmem:[%s0] sm:$0xff]
    %v56 = vld [vmem:[%s0 + $0x8] sm:$0xf]
    %v57 = vsel %vm29, 1, 0
    %v58 = vsel %vm30, 1, 0
    %vm59 = vcmp.eq.s32.totalorder %v57, 1
    %vm60 = vcmp.eq.s32.totalorder %v58, 1
    %vm61 = vmpackc.low %vm60, %vm59
    %v62 = vsel %vm61, 65537, 0
    %63 = vrot.lane.b32.xlu0 %v62, 2
    %v64 = vpop.permute.xlu0 %63
    %v65 = vrot.slane %v64, 4
    %vm66 = vcmask 15360
    %v67 = vsel %vm66, %v65, %v64
    %vm68 = vcmp.ne.s16.totalorder %v67, 0
    %vm69 = vcmp.ne.s16.totalorder %v65, 0
    %v70 = vsel %vm68, %v55, 0
    %v71 = vsel %vm69, %v56, 0
    %74 = vrot.lane.b32.xlu0 %v70, 126
    %v75 = vpop.permute.xlu0 %74
    %76 = vrot.lane.b32.xlu0 %v71, 126
    %v77 = vpop.permute.xlu0 %76
    %v78 = vrot.slane %v75, 4
    %v79 = vrot.slane %v77, 4
    %v80 = vsel %vm49, %v78, %v79
    %vm81 = vcmask 1031168
    %v82 = vsel %vm81, %v75, %v80
    %84 = vst [vmem:[#allocation2 + $0x20] sm:$0xff] %v82
    %v85 = vld [vmem:[%s0] sm:$0xff]
    %v86 = vld [vmem:[%s0 + $0x8] sm:$0xf]
    %v87 = vsel %vm36, 65537, 0
    %88 = vrot.lane.b32.xlu0 %v87, 16
    %v89 = vpop.permute.xlu0 %88
    %v90 = vrot.slane %v89, 4
    %vm91 = vcmask 130048
    %v92 = vsel %vm91, %v90, %v89
    %vm93 = vcmp.ne.s16.totalorder %v92, 0
    %vm94 = vcmp.ne.s16.totalorder %v90, 0
    %v95 = vsel %vm93, %v85, 0
    %v96 = vsel %vm94, %v86, 0
    %99 = vrot.lane.b32.xlu0 %v95, 112
    %v100 = vpop.permute.xlu0 %99
    %101 = vrot.lane.b32.xlu0 %v96, 112
    %v102 = vpop.permute.xlu0 %101
    %v103 = vrot.slane %v100, 4
    %v104 = vrot.slane %v102, 4
    %v105 = vsel %vm49, %v103, %v104
    %vm106 = vcmask 916480
    %v107 = vsel %vm106, %v100, %v105
    %109 = vst [vmem:[#allocation2 + $0x30] sm:$0xff] %v107
    %v110 = vld [vmem:[%s0] sm:$0xff]
    %v111 = vld [vmem:[%s0 + $0x8] sm:$0xf]
    %114 = vrot.lane.b32.xlu0 %v110, 111
    %v115 = vpop.permute.xlu0 %114
    %116 = vrot.lane.b32.xlu0 %v111, 111
    %v117 = vpop.permute.xlu0 %116
    %v118 = vrot.slane %v115, 4
    %v119 = vrot.slane %v117, 4
    %v120 = vsel %vm49, %v118, %v119
    %vm121 = vcmask 908288
    %v122 = vsel %vm121, %v115, %v120
    %124 = vst [vmem:[#allocation2 + $0x40] sm:$0xff] %v122
    %v125 = vld [vmem:[%s0] sm:$0xff]
    %v126 = vld [vmem:[%s0 + $0x8] sm:$0xf]
    %127 = vrot.lane.b32.xlu0 %v62, 18
    %v128 = vpop.permute.xlu0 %127
    %v129 = vrot.slane %v128, 4
    %vm130 = vcmask 146432
    %v131 = vsel %vm130, %v129, %v128
    %vm132 = vcmp.ne.s16.totalorder %v131, 0
    %vm133 = vcmp.ne.s16.totalorder %v129, 0
    %v134 = vsel %vm132, %v125, 0
    %v135 = vsel %vm133, %v126, 0
    %138 = vrot.lane.b32.xlu0 %v134, 110
    %v139 = vpop.permute.xlu0 %138
    %140 = vrot.lane.b32.xlu0 %v135, 110
    %v141 = vpop.permute.xlu0 %140
    %v142 = vrot.slane %v139, 4
    %v143 = vrot.slane %v141, 4
    %v144 = vsel %vm49, %v142, %v143
    %vm145 = vcmask 900096
    %v146 = vsel %vm145, %v139, %v144
    %148 = vst [vmem:[#allocation2 + $0x50] sm:$0xff] %v146
    %v149 = vld [vmem:[%s0] sm:$0xff]
    %v150 = vld [vmem:[%s0 + $0x8] sm:$0xf]
    %151 = vrot.lane.b32.xlu0 %v87, 32
    %v152 = vpop.permute.xlu0 %151
    %v153 = vrot.slane %v152, 4
    %vm154 = vcmask 261120
    %v155 = vsel %vm154, %v153, %v152
    %vm156 = vcmp.ne.s16.totalorder %v155, 0
    %vm157 = vcmp.ne.s16.totalorder %v153, 0
    %v158 = vsel %vm156, %v149, 0
    %v159 = vsel %vm157, %v150, 0
    %162 = vrot.lane.b32.xlu0 %v158, 96
    %v163 = vpop.permute.xlu0 %162
    %164 = vrot.lane.b32.xlu0 %v159, 96
    %v165 = vpop.permute.xlu0 %164
    %v166 = vrot.slane %v163, 4
    %v167 = vrot.slane %v165, 4
    %v168 = vsel %vm49, %v166, %v167
    %vm169 = vcmask 785408
    %v170 = vsel %vm169, %v163, %v168
    %172 = vst [vmem:[#allocation2 + $0x60] sm:$0xff] %v170
    %v173 = vld [vmem:[%s0] sm:$0xff]
    %v174 = vld [vmem:[%s0 + $0x8] sm:$0xf]
    %177 = vrot.lane.b32.xlu0 %v173, 95
    %v178 = vpop.permute.xlu0 %177
    %179 = vrot.lane.b32.xlu0 %v174, 95
    %v180 = vpop.permute.xlu0 %179
    %v181 = vrot.slane %v178, 4
    %v182 = vrot.slane %v180, 4
    %v183 = vsel %vm49, %v181, %v182
    %vm184 = vcmask 777216
    %v185 = vsel %vm184, %v178, %v183
    %187 = vst [vmem:[#allocation2 + $0x70] sm:$0xff] %v185
    %v188 = vld [vmem:[%s0] sm:$0xff]
    %v189 = vld [vmem:[%s0 + $0x8] sm:$0xf]
    %190 = vrot.lane.b32.xlu0 %v62, 34
    %v191 = vpop.permute.xlu0 %190
    %v192 = vrot.slane %v191, 4
    %vm193 = vcmask 277504
    %v194 = vsel %vm193, %v192, %v191
    %vm195 = vcmp.ne.s16.totalorder %v194, 0
    %vm196 = vcmp.ne.s16.totalorder %v192, 0
    %v197 = vsel %vm195, %v188, 0
    %v198 = vsel %vm196, %v189, 0
    %201 = vrot.lane.b32.xlu0 %v197, 94
    %v202 = vpop.permute.xlu0 %201
    %203 = vrot.lane.b32.xlu0 %v198, 94
    %v204 = vpop.permute.xlu0 %203
    %v205 = vrot.slane %v202, 4
    %v206 = vrot.slane %v204, 4
    %v207 = vsel %vm49, %v205, %v206
    %vm208 = vcmask 769024
    %v209 = vsel %vm208, %v202, %v207
    %211 = vst [vmem:[#allocation2 + $0x80] sm:$0xff] %v209
    %s212 = scalar_lea.vmem %s0, 12
    %v213 = vld [vmem:[%s212] sm:$0xff]
    %v214 = vsel %vm36, %v213, 0
    %215 = vst [vmem:[#allocation2 + $0x8] sm:$0xff] %v214
    %v216 = vld [vmem:[%s212] sm:$0xff]
    %v217 = vld [vmem:[%s212 + $0x8] sm:$0xf]
    %220 = vrot.lane.b32.xlu0 %v216, 127
    %v221 = vpop.permute.xlu0 %220
    %222 = vrot.lane.b32.xlu0 %v217, 127
    %v223 = vpop.permute.xlu0 %222
    %v224 = vrot.slane %v221, 4
    %v225 = vrot.slane %v223, 4
    %v226 = vsel %vm49, %v224, %v225
    %v227 = vsel %vm51, %v221, %v226
    %229 = vst [vmem:[#allocation2 + $0x18] sm:$0xff] %v227
    %v230 = vld [vmem:[%s212] sm:$0xff]
    %v231 = vld [vmem:[%s212 + $0x8] sm:$0xf]
    %v232 = vsel %vm68, %v230, 0
    %v233 = vsel %vm69, %v231, 0
    %236 = vrot.lane.b32.xlu0 %v232, 126
    %v237 = vpop.permute.xlu0 %236
    %238 = vrot.lane.b32.xlu0 %v233, 126
    %v239 = vpop.permute.xlu0 %238
    %v240 = vrot.slane %v237, 4
    %v241 = vrot.slane %v239, 4
    %v242 = vsel %vm49, %v240, %v241
    %v243 = vsel %vm81, %v237, %v242
    %245 = vst [vmem:[#allocation2 + $0x28] sm:$0xff] %v243
    %v246 = vld [vmem:[%s212] sm:$0xff]
    %v247 = vld [vmem:[%s212 + $0x8] sm:$0xf]
    %v248 = vsel %vm93, %v246, 0
    %v249 = vsel %vm94, %v247, 0
    %252 = vrot.lane.b32.xlu0 %v248, 112
    %v253 = vpop.permute.xlu0 %252
    %254 = vrot.lane.b32.xlu0 %v249, 112
    %v255 = vpop.permute.xlu0 %254
    %v256 = vrot.slane %v253, 4
    %v257 = vrot.slane %v255, 4
    %v258 = vsel %vm49, %v256, %v257
    %v259 = vsel %vm106, %v253, %v258
    %261 = vst [vmem:[#allocation2 + $0x38] sm:$0xff] %v259
    %v262 = vld [vmem:[%s212] sm:$0xff]
    %v263 = vld [vmem:[%s212 + $0x8] sm:$0xf]
    %266 = vrot.lane.b32.xlu0 %v262, 111
    %v267 = vpop.permute.xlu0 %266
    %268 = vrot.lane.b32.xlu0 %v263, 111
    %v269 = vpop.permute.xlu0 %268
    %v270 = vrot.slane %v267, 4
    %v271 = vrot.slane %v269, 4
    %v272 = vsel %vm49, %v270, %v271
    %v273 = vsel %vm121, %v267, %v272
    %275 = vst [vmem:[#allocation2 + $0x48] sm:$0xff] %v273
    %v276 = vld [vmem:[%s212] sm:$0xff]
    %v277 = vld [vmem:[%s212 + $0x8] sm:$0xf]
    %v278 = vsel %vm132, %v276, 0
    %v279 = vsel %vm133, %v277, 0
    %282 = vrot.lane.b32.xlu0 %v278, 110
    %v283 = vpop.permute.xlu0 %282
    %284 = vrot.lane.b32.xlu0 %v279, 110
    %v285 = vpop.permute.xlu0 %284
    %v286 = vrot.slane %v283, 4
    %v287 = vrot.slane %v285, 4
    %v288 = vsel %vm49, %v286, %v287
    %v289 = vsel %vm145, %v283, %v288
    %291 = vst [vmem:[#allocation2 + $0x58] sm:$0xff] %v289
    %v292 = vld [vmem:[%s212] sm:$0xff]
    %v293 = vld [vmem:[%s212 + $0x8] sm:$0xf]
    %v294 = vsel %vm156, %v292, 0
    %v295 = vsel %vm157, %v293, 0
    %298 = vrot.lane.b32.xlu0 %v294, 96
    %v299 = vpop.permute.xlu0 %298
    %300 = vrot.lane.b32.xlu0 %v295, 96
    %v301 = vpop.permute.xlu0 %300
    %v302 = vrot.slane %v299, 4
    %v303 = vrot.slane %v301, 4
    %v304 = vsel %vm49, %v302, %v303
    %v305 = vsel %vm169, %v299, %v304
    %307 = vst [vmem:[#allocation2 + $0x68] sm:$0xff] %v305
    %v308 = vld [vmem:[%s212] sm:$0xff]
    %v309 = vld [vmem:[%s212 + $0x8] sm:$0xf]
    %312 = vrot.lane.b32.xlu0 %v308, 95
    %v313 = vpop.permute.xlu0 %312
    %314 = vrot.lane.b32.xlu0 %v309, 95
    %v315 = vpop.permute.xlu0 %314
    %v316 = vrot.slane %v313, 4
    %v317 = vrot.slane %v315, 4
    %v318 = vsel %vm49, %v316, %v317
    %v319 = vsel %vm184, %v313, %v318
    %321 = vst [vmem:[#allocation2 + $0x78] sm:$0xff] %v319
    %v322 = vld [vmem:[%s212] sm:$0xff]
    %v323 = vld [vmem:[%s212 + $0x8] sm:$0xf]
    %v324 = vsel %vm195, %v322, 0
    %v325 = vsel %vm196, %v323, 0
    %328 = vrot.lane.b32.xlu0 %v324, 94
    %v329 = vpop.permute.xlu0 %328
    %330 = vrot.lane.b32.xlu0 %v325, 94
    %v331 = vpop.permute.xlu0 %330
    %v332 = vrot.slane %v329, 4
    %v333 = vrot.slane %v331, 4
    %v334 = vsel %vm49, %v332, %v333
    %v335 = vsel %vm208, %v329, %v334
    %337 = vst [vmem:[#allocation2 + $0x88] sm:$0xff] %v335
    %v338 = vld [vmem:[%s1] sm:$0xf]
    %v339 = vld [vmem:[%s1 + $0x4] sm:$0xf]
    %v340 = vld [vmem:[%s1 + $0x8] sm:$0xf]
    %v341 = vld [vmem:[%s1 + $0xc] sm:$0xf]
    %v342 = vld [vmem:[#allocation2] sm:$0xff]
    %v343 = vld [vmem:[#allocation2 + $0x8] sm:$0xff]
    %v344 = vld [vmem:[#allocation2 + $0x10] sm:$0xff]
    %v345 = vld [vmem:[#allocation2 + $0x18] sm:$0xff]
    %v346 = vld [vmem:[#allocation2 + $0x20] sm:$0xff]
    %v347 = vld [vmem:[#allocation2 + $0x28] sm:$0xff]
    %v348 = vld [vmem:[#allocation2 + $0x30] sm:$0xff]
    %v349 = vld [vmem:[#allocation2 + $0x38] sm:$0xff]
    %v350 = vld [vmem:[#allocation2 + $0x40] sm:$0xff]
    %v351 = vld [vmem:[#allocation2 + $0x48] sm:$0xff]
    %v352 = vld [vmem:[#allocation2 + $0x50] sm:$0xff]
    %v353 = vld [vmem:[#allocation2 + $0x58] sm:$0xff]
    %v354 = vld [vmem:[#allocation2 + $0x60] sm:$0xff]
    %v355 = vld [vmem:[#allocation2 + $0x68] sm:$0xff]
    %v356 = vld [vmem:[#allocation2 + $0x70] sm:$0xff]
    %v357 = vld [vmem:[#allocation2 + $0x78] sm:$0xff]
    %v358 = vld [vmem:[#allocation2 + $0x80] sm:$0xff]
    %v359 = vld [vmem:[#allocation2 + $0x88] sm:$0xff]
    %v360 = vld [vmem:[%s2] sm:$0xff]
    %v361 = vld [vmem:[%s2 + $0x8] sm:$0xff]
    %v362 = vld [vmem:[%s2 + $0x10] sm:$0xff]
    %v363 = vld [vmem:[%s2 + $0x18] sm:$0xff]
    %365 = vset.pattern.permute.xlu0 0
    %366 = vperm.xlu0 %365, %v360
    %v367 = vpop.permute.xlu0 %366
    %370 = vset.pattern.permute.xlu0 0
    %371 = vperm.xlu0 %370, %v361
    %v372 = vpop.permute.xlu0 %371
    %375 = vset.pattern.permute.xlu0 0
    %376 = vperm.xlu0 %375, %v362
    %v377 = vpop.permute.xlu0 %376
    %380 = vset.pattern.permute.xlu0 0
    %381 = vperm.xlu0 %380, %v363
    %v382 = vpop.permute.xlu0 %381
    %v388 = vunpack.c.l.b16 %v338
    %v389 = vunpack.c.l.b16 %v339
    %v390 = vunpack.c.l.b16 %v340
    %v391 = vunpack.c.l.b16 %v341
    %v392 = vpack.c.b16 %v389, %v388
    %v393 = vpack.c.b16 %v391, %v390
    %v412 = vunpack.c.l.b16 %v342
    %v413 = vunpack.c.h.b16 %v342
    %v414 = vunpack.c.l.b16 %v343
    %v415 = vunpack.c.h.b16 %v343
    %v416 = vunpack.c.l.b16 %v344
    %v417 = vunpack.c.h.b16 %v344
    %v418 = vunpack.c.l.b16 %v345
    %v419 = vunpack.c.h.b16 %v345
    %v420 = vunpack.c.l.b16 %v346
    %v421 = vunpack.c.h.b16 %v346
    %v422 = vunpack.c.l.b16 %v347
    %v423 = vunpack.c.h.b16 %v347
    %v424 = vunpack.c.l.b16 %v348
    %v425 = vunpack.c.h.b16 %v348
    %v426 = vunpack.c.l.b16 %v349
    %v427 = vunpack.c.h.b16 %v349
    %v428 = vunpack.c.l.b16 %v350
    %v429 = vunpack.c.h.b16 %v350
    %v430 = vunpack.c.l.b16 %v351
    %v431 = vunpack.c.h.b16 %v351
    %v432 = vunpack.c.l.b16 %v352
    %v433 = vunpack.c.h.b16 %v352
    %v434 = vunpack.c.l.b16 %v353
    %v435 = vunpack.c.h.b16 %v353
    %v436 = vunpack.c.l.b16 %v354
    %v437 = vunpack.c.h.b16 %v354
    %v438 = vunpack.c.l.b16 %v355
    %v439 = vunpack.c.h.b16 %v355
    %v440 = vunpack.c.l.b16 %v356
    %v441 = vunpack.c.h.b16 %v356
    %v442 = vunpack.c.l.b16 %v357
    %v443 = vunpack.c.h.b16 %v357
    %v444 = vunpack.c.l.b16 %v358
    %v445 = vunpack.c.h.b16 %v358
    %v446 = vunpack.c.l.b16 %v359
    %v447 = vunpack.c.h.b16 %v359
    %v448 = vpack.c.b16 %v416, %v412
    %v449 = vpack.c.b16 %v417, %v413
    %v450 = vpack.c.b16 %v418, %v414
    %v451 = vpack.c.b16 %v419, %v415
    %v452 = vpack.c.b16 %v424, %v420
    %v453 = vpack.c.b16 %v425, %v421
    %v454 = vpack.c.b16 %v426, %v422
    %v455 = vpack.c.b16 %v427, %v423
    %v456 = vpack.c.b16 %v432, %v428
    %v457 = vpack.c.b16 %v433, %v429
    %v458 = vpack.c.b16 %v434, %v430
    %v459 = vpack.c.b16 %v435, %v431
    %v460 = vpack.c.b16 %v440, %v436
    %v461 = vpack.c.b16 %v441, %v437
    %v462 = vpack.c.b16 %v442, %v438
    %v463 = vpack.c.b16 %v443, %v439
    %v464 = vpack.c.b16 %v444, %v444
    %v465 = vpack.c.b16 %v445, %v445
    %v466 = vpack.c.b16 %v446, %v446
    %v467 = vpack.c.b16 %v447, %v447
    %vm484 = vcmask 588800
    %v486 = vsel %vm484, %v392, 0
    %v489 = vsel %vm484, %v393, 0
    %vm491 = vcmask 1043456
    %v493 = vsel %vm491, %v464, 0
    %v496 = vsel %vm491, %v465, 0
    %v499 = vsel %vm491, %v466, 0
    %v502 = vsel %vm491, %v467, 0
    %504 = vmatprep.subr.bf16.mxu0 %v449
    %505 = vmatpush1.bf16.msra.mxu0 %v448
    %506 = vmatprep.subr.bf16.mxu0 %v453
    %507 = vmatpush1.bf16.msra.mxu0 %v452
    %508 = vmatprep.subr.bf16.mxu0 %v457
    %509 = vmatpush1.bf16.msra.mxu0 %v456
    %510 = vmatprep.subr.bf16.mxu0 %v461
    %511 = vmatpush1.bf16.msra.mxu0 %v460
    %512 = vmatprep.subr.bf16.mxu0 %v496
    %513 = vmatpush1.bf16.msra.mxu0 %v493
    %514 = vmatprep.subr.bf16.mxu0 0
    %515 = vmatpush1.bf16.msra.mxu0 0
    %516 = vmatprep.subr.bf16.mxu0 0
    %517 = vmatpush1.bf16.msra.mxu0 0
    %518 = vmatprep.subr.bf16.mxu0 0
    %519 = vmatpush1.bf16.msra.mxu0 0
    %520 = vmatprep.subr.bf16.mxu0 0
    %521 = vmatpush1.bf16.msra.mxu0 0
    %522 = vmatprep.subr.bf16.mxu0 0
    %523 = vmatpush1.bf16.msra.mxu0 0
    %524 = vmatprep.subr.bf16.mxu0 0
    %525 = vmatpush1.bf16.msra.mxu0 0
    %526 = vmatprep.subr.bf16.mxu0 0
    %527 = vmatpush1.bf16.msra.mxu0 0
    %528 = vmatprep.subr.bf16.mxu0 0
    %529 = vmatpush1.bf16.msra.mxu0 0
    %530 = vmatprep.subr.bf16.mxu0 0
    %531 = vmatpush1.bf16.msra.mxu0 0
    %532 = vmatprep.subr.bf16.mxu0 0
    %533 = vmatpush1.bf16.msra.mxu0 0
    %534 = vmatprep.subr.bf16.mxu0 0
    %535 = vmatpush1.bf16.msra.mxu0 0
    %536 = vmatprep.mubr.bf16.mxu0 0
    %537 = vmatmul.mubr.bf16.gmra.mrb[0].mxu0 %v486
    %v538 = vpop.f32.mrb[0].mxu0
    %v539 = vadd.f32 %v367, %v538
    %v540 = vpop.f32.mrb[0].mxu0
    %v541 = vadd.f32 %v367, %v540
    %v542 = vpop.f32.mrb[0].mxu0
    %v543 = vadd.f32 %v372, %v542
    %v544 = vpop.f32.mrb[0].mxu0
    %v545 = vadd.f32 %v372, %v544
    %546 = vmatprep.mubr.bf16.mxu0 0
    %547 = vmatmul.mubr.bf16.gmra.mrb[0].mxu0 %v489
    %v548 = vpop.f32.mrb[0].mxu0
    %v549 = vadd.f32 %v377, %v548
    %v550 = vpop.f32.mrb[0].mxu0
    %v551 = vadd.f32 %v377, %v550
    %v552 = vpop.f32.mrb[0].mxu0
    %v553 = vadd.f32 %v382, %v552
    %v554 = vpop.f32.mrb[0].mxu0
    %v555 = vadd.f32 %v382, %v554
    %556 = vdwg.mxu0
    %557 = vmatprep.subr.bf16.mxu0 %v451
    %558 = vmatpush1.bf16.msra.mxu0 %v450
    %559 = vmatprep.subr.bf16.mxu0 %v455
    %560 = vmatpush1.bf16.msra.mxu0 %v454
    %561 = vmatprep.subr.bf16.mxu0 %v459
    %562 = vmatpush1.bf16.msra.mxu0 %v458
    %563 = vmatprep.subr.bf16.mxu0 %v463
    %564 = vmatpush1.bf16.msra.mxu0 %v462
    %565 = vmatprep.subr.bf16.mxu0 %v502
    %566 = vmatpush1.bf16.msra.mxu0 %v499
    %567 = vmatprep.subr.bf16.mxu0 0
    %568 = vmatpush1.bf16.msra.mxu0 0
    %569 = vmatprep.subr.bf16.mxu0 0
    %570 = vmatpush1.bf16.msra.mxu0 0
    %571 = vmatprep.subr.bf16.mxu0 0
    %572 = vmatpush1.bf16.msra.mxu0 0
    %573 = vmatprep.subr.bf16.mxu0 0
    %574 = vmatpush1.bf16.msra.mxu0 0
    %575 = vmatprep.subr.bf16.mxu0 0
    %576 = vmatpush1.bf16.msra.mxu0 0
    %577 = vmatprep.subr.bf16.mxu0 0
    %578 = vmatpush1.bf16.msra.mxu0 0
    %579 = vmatprep.subr.bf16.mxu0 0
    %580 = vmatpush1.bf16.msra.mxu0 0
    %581 = vmatprep.subr.bf16.mxu0 0
    %582 = vmatpush1.bf16.msra.mxu0 0
    %583 = vmatprep.subr.bf16.mxu0 0
    %584 = vmatpush1.bf16.msra.mxu0 0
    %585 = vmatprep.subr.bf16.mxu0 0
    %586 = vmatpush1.bf16.msra.mxu0 0
    %587 = vmatprep.subr.bf16.mxu0 0
    %588 = vmatpush1.bf16.msra.mxu0 0
    %589 = vmatprep.mubr.bf16.mxu0 0
    %590 = vmatmul.mubr.bf16.gmra.mrb[0].mxu0 %v486
    %v591 = vpop.f32.mrb[0].mxu0
    %v592 = vadd.f32 %v367, %v591
    %v593 = vpop.f32.mrb[0].mxu0
    %v594 = vadd.f32 %v367, %v593
    %v595 = vpop.f32.mrb[0].mxu0
    %v596 = vadd.f32 %v372, %v595
    %v597 = vpop.f32.mrb[0].mxu0
    %v598 = vadd.f32 %v372, %v597
    %599 = vmatprep.mubr.bf16.mxu0 0
    %600 = vmatmul.mubr.bf16.gmra.mrb[0].mxu0 %v489
    %v601 = vpop.f32.mrb[0].mxu0
    %v602 = vadd.f32 %v377, %v601
    %v603 = vpop.f32.mrb[0].mxu0
    %v604 = vadd.f32 %v377, %v603
    %v605 = vpop.f32.mrb[0].mxu0
    %v606 = vadd.f32 %v382, %v605
    %v607 = vpop.f32.mrb[0].mxu0
    %v608 = vadd.f32 %v382, %v607
    %609 = vdwg.mxu0
    %s610 = sld [smem:[#allocation3]]
    %vm611 = vcmp.ge.f32.partialorder %v539, 0.0
    %vm612 = vcmp.ge.f32.partialorder %v541, 0.0
    %vm613 = vcmp.ge.f32.partialorder %v592, 0.0
    %vm614 = vcmp.ge.f32.partialorder %v594, 0.0
    %vm615 = vcmp.ge.f32.partialorder %v543, 0.0
    %vm616 = vcmp.ge.f32.partialorder %v545, 0.0
    %vm617 = vcmp.ge.f32.partialorder %v596, 0.0
    %vm618 = vcmp.ge.f32.partialorder %v598, 0.0
    %vm619 = vcmp.ge.f32.partialorder %v549, 0.0
    %vm620 = vcmp.ge.f32.partialorder %v551, 0.0
    %vm621 = vcmp.ge.f32.partialorder %v602, 0.0
    %vm622 = vcmp.ge.f32.partialorder %v604, 0.0
    %vm623 = vcmp.ge.f32.partialorder %v553, 0.0
    %vm624 = vcmp.ge.f32.partialorder %v555, 0.0
    %vm625 = vcmp.ge.f32.partialorder %v606, 0.0
    %vm626 = vcmp.ge.f32.partialorder %v608, 0.0
    %v627 = vstv %s610
    %v628 = vmul.f32 %v627, %v539
    %v629 = vmul.f32 %v627, %v541
    %v630 = vmul.f32 %v627, %v592
    %v631 = vmul.f32 %v627, %v594
    %v632 = vmul.f32 %v627, %v543
    %v633 = vmul.f32 %v627, %v545
    %v634 = vmul.f32 %v627, %v596
    %v635 = vmul.f32 %v627, %v598
    %v636 = vmul.f32 %v627, %v549
    %v637 = vmul.f32 %v627, %v551
    %v638 = vmul.f32 %v627, %v602
    %v639 = vmul.f32 %v627, %v604
    %v640 = vmul.f32 %v627, %v553
    %v641 = vmul.f32 %v627, %v555
    %v642 = vmul.f32 %v627, %v606
    %v643 = vmul.f32 %v627, %v608
    %v644 = vsel %vm611, %v539, %v628
    %v645 = vsel %vm612, %v541, %v629
    %v646 = vsel %vm613, %v592, %v630
    %v647 = vsel %vm614, %v594, %v631
    %v648 = vsel %vm615, %v543, %v632
    %v649 = vsel %vm616, %v545, %v633
    %v650 = vsel %vm617, %v596, %v634
    %v651 = vsel %vm618, %v598, %v635
    %v652 = vsel %vm619, %v549, %v636
    %v653 = vsel %vm620, %v551, %v637
    %v654 = vsel %vm621, %v602, %v638
    %v655 = vsel %vm622, %v604, %v639
    %v656 = vsel %vm623, %v553, %v640
    %v657 = vsel %vm624, %v555, %v641
    %v658 = vsel %vm625, %v606, %v642
    %v659 = vsel %vm626, %v608, %v643
    %660 = vst [vmem:[#allocation4] sm:$0xff] %v644
    %661 = vst [vmem:[#allocation4 + $0x8] sm:$0xff] %v645
    %662 = vst [vmem:[#allocation4 + $0x10] sm:$0xff] %v646
    %663 = vst [vmem:[#allocation4 + $0x18] sm:$0xff] %v647
    %664 = vst [vmem:[#allocation4 + $0x20] sm:$0xff] %v648
    %665 = vst [vmem:[#allocation4 + $0x28] sm:$0xff] %v649
    %666 = vst [vmem:[#allocation4 + $0x30] sm:$0xff] %v650
    %667 = vst [vmem:[#allocation4 + $0x38] sm:$0xff] %v651
    %668 = vst [vmem:[#allocation4 + $0x40] sm:$0xff] %v652
    %669 = vst [vmem:[#allocation4 + $0x48] sm:$0xff] %v653
    %670 = vst [vmem:[#allocation4 + $0x50] sm:$0xff] %v654
    %671 = vst [vmem:[#allocation4 + $0x58] sm:$0xff] %v655
    %672 = vst [vmem:[#allocation4 + $0x60] sm:$0xff] %v656
    %673 = vst [vmem:[#allocation4 + $0x68] sm:$0xff] %v657
    %674 = vst [vmem:[#allocation4 + $0x70] sm:$0xff] %v658
    %675 = vst [vmem:[#allocation4 + $0x78] sm:$0xff] %v659
    // Predicated region
    $region18: #{tpu_custom_call.1} parent=1 // pred_check
      _
    $region19: #{tpu_custom_call.1} parent=1 // pred_check_branch
      %677 = sbr.rel (0) target = $region21
    $region20: #{tpu_custom_call.1} parent=1 // pred_region
      %s679 = ssub.s32 2048, 2048
      %680 = vsyncadd [#allocation5], %s679
      %s681 = sshll.u32 [#allocation4], 4
      %s682 = int_to_ptr.vmem [resolvable:$true] %s681
      %687 = dma.vmem_to_hbm [thread:$0]  %s682, 2048, %s4, [#allocation5], 512, 512, 32
    $region21: #{tpu_custom_call.1} parent=1 // pred_fallthru
      _
    // Predicated region
    $region22: #{tpu_custom_call.1} parent=1 // pred_check
      _
    $region23: #{tpu_custom_call.1} parent=1 // pred_check_branch
      %689 = sbr.rel (0) target = $region25
    $region24: #{tpu_custom_call.1} parent=1 // pred_region
      %690 = dma.done [#allocation5], 2048
    $region25: #{tpu_custom_call.1} parent=1 // pred_fallthru
      _
    %691 = vsyncpa [#allocation5], 1

</llo_original>
